<compile_context>
chip_gen: v6e
topology: v6e:2x2x1
jax: 0.10.0
libtpu: 0.0.40
codegen_flags: <defaults>
</compile_context>

<pallas_src>
import jax
import jax.numpy as jnp
from jax.experimental import pallas as pl
from jax.experimental.pallas import tpu as pltpu


def _round_up(x, m):
    return ((x + m - 1) // m) * m


def _bernoulli_roi_kernel(x_ref, w1_ref, b1_ref, w2_ref, b2_ref, w3_ref, b3_ref,
                          out_ref, mask_ref):
    x = x_ref[...]                                               # (TM, E) f32

    # feature_extractor: Linear(E,2E) -> ReLU -> Linear(2E,E) -> ReLU -> Linear(E,1)
    # MXU matmuls in bf16 (2x throughput, half weight VMEM), f32 accumulation.
    h1 = jnp.dot(x.astype(jnp.bfloat16), w1_ref[...],
                 preferred_element_type=jnp.float32) + b1_ref[...]
    h1 = jnp.maximum(h1, 0.0)                                    # (TM, 2E) f32
    h2 = jnp.dot(h1.astype(jnp.bfloat16), w2_ref[...],
                 preferred_element_type=jnp.float32) + b2_ref[...]
    h2 = jnp.maximum(h2, 0.0)                                    # (TM, E) f32

    # Final Linear(E, 1): a 1-column MXU matmul wastes the 128/256-wide result
    # path, so route it to VPU (multiply) + XLU (lane reduce) instead.
    log_score = jnp.sum(h2 * w3_ref[...], axis=-1, keepdims=True) + b3_ref[0]  # (TM,1)

    # Eval-mode sampling: sigmoid(log_score) = 1 / (1 + exp(-z)); exp and the
    # approximate reciprocal both go to the EUP slot.
    # TODO(synk): training-mode logistic noise (log(u) - log(1-u)) is not
    # implemented (eval path only); could be added with pltpu.prng_*, but
    # torch's RNG stream is not reproducible anyway.
    bern_mask = pl.reciprocal(1.0 + jnp.exp(-log_score), approx=True)  # (TM, 1)

    mask_ref[...] = bern_mask.astype(mask_ref.dtype)
    # Broadcast multiply against the original f32 tile: output keeps the f32
    # precision of emb, only the mask carries the bf16-matmul error.
    out_ref[...] = (x * bern_mask).astype(out_ref.dtype)


def bernoulli_roi_extraction(emb, w1, b1, w2, b2, w3, b3, *, tile_m=256,
                             vmem_limit_bytes=64 * 1024 * 1024):
    """emb: [B, N, E] float32, weights stored [in, out].
    Returns (emb * mask [B,N,E], mask [B,N,1]) -- eval-mode forward."""
    B, N, E = emb.shape
    M = B * N
    x = emb.reshape(M, E)

    # Row tile: as large as VMEM comfortably allows (big MXU LHS, few grid
    # steps), but never bigger than the 8-aligned problem so tiny inputs do
    # not pay for a full 256-row tile of padding.  On v7x keep M // tile_m
    # >= ~8 when possible so the parallel axis spans both TensorCores.
    tile_m = max(8, min(tile_m, _round_up(M, 8)))
    m_pad = _round_up(M, tile_m)
    if m_pad != M:
        # Tail handling: zero-pad rows, slice the outputs back afterwards.
        x = jnp.pad(x, ((0, m_pad - M), (0, 0)))

    # bf16 weights for the MXU; w3 / biases stay f32 (VPU path).
    w1_bf = w1.astype(jnp.bfloat16)
    w2_bf = w2.astype(jnp.bfloat16)
    b1_2d = b1.reshape(1, 2 * E).astype(jnp.float32)
    b2_2d = b2.reshape(1, E).astype(jnp.float32)
    w3_row = w3.reshape(1, E).astype(jnp.float32)
    b3_1d = b3.reshape(1).astype(jnp.float32)          # scalar -> SMEM

    grid = (m_pad // tile_m,)
    const = lambda i: (0, 0)                            # grid-invariant blocks

    out, mask = pl.pallas_call(
        _bernoulli_roi_kernel,
        out_shape=(
            jax.ShapeDtypeStruct((m_pad, E), emb.dtype),
            jax.ShapeDtypeStruct((m_pad, 1), emb.dtype),
        ),
        grid_spec=pltpu.PrefetchScalarGridSpec(
            num_scalar_prefetch=0,
            grid=grid,
            in_specs=[
                pl.BlockSpec((tile_m, E), lambda i: (i, 0)),        # x rows
                pl.BlockSpec((E, 2 * E), const),                    # W1 (bf16)
                pl.BlockSpec((1, 2 * E), const),                    # b1
                pl.BlockSpec((2 * E, E), const),                    # W2 (bf16)
                pl.BlockSpec((1, E), const),                        # b2
                pl.BlockSpec((1, E), const),                        # W3 row (f32)
                pl.BlockSpec(memory_space=pltpu.MemorySpace.SMEM),  # b3 scalar
            ],
            out_specs=[
                pl.BlockSpec((tile_m, E), lambda i: (i, 0)),        # emb * mask
                pl.BlockSpec((tile_m, 1), lambda i: (i, 0)),        # mask
            ],
        ),
        compiler_params=pltpu.CompilerParams(
            dimension_semantics=("parallel",),
            vmem_limit_bytes=vmem_limit_bytes,
        ),
    )(x, w1_bf, b1_2d, w2_bf, b2_2d, w3_row, b3_1d)

    out = out[:M].reshape(B, N, E)
    mask = mask[:M].reshape(B, N, 1)
    return out, mask


def _init_params(key, embed_dim):
    """Deterministic synthetic init mimicking nn.Linear shapes.
    Stored as [in, out] (transposed vs torch's [out, in])."""
    k = jax.random.split(key, 6)

    def lin(kw, kb, fan_in, fan_out):
        bound = 1.0 / jnp.sqrt(fan_in)
        w = jax.random.uniform(kw, (fan_in, fan_out), jnp.float32, -bound, bound)
        b = jax.random.uniform(kb, (fan_out,), jnp.float32, -bound, bound)
        return w, b

    w1, b1 = lin(k[0], k[1], embed_dim, embed_dim * 2)
    w2, b2 = lin(k[2], k[3], embed_dim * 2, embed_dim)
    w3, b3 = lin(k[4], k[5], embed_dim, 1)
    return w1, b1, w2, b2, w3, b3


def _reference(emb, w1, b1, w2, b2, w3, b3):
    h1 = jax.nn.relu(emb @ w1 + b1)
    h2 = jax.nn.relu(h1 @ w2 + b2)
    log_score = h2 @ w3 + b3
    mask = jax.nn.sigmoid(log_score)
    return emb * mask, mask


if __name__ == "__main__":
    B, N, E = 2, 8, 32
    key = jax.random.PRNGKey(0)
    k_emb, k_par = jax.random.split(key)
    emb = jax.random.normal(k_emb, (B, N, E), jnp.float32)
    params = _init_params(k_par, E)

    out, mask = bernoulli_roi_extraction(emb, *params)
    out = jax.block_until_ready(out)
    mask = jax.block_until_ready(mask)

    ref_out, ref_mask = _reference(emb, *params)
    assert out.shape == (B, N, E) and mask.shape == (B, N, 1)
    # bf16 matmuls + approx reciprocal vs the pure-f32 reference -> loose tol.
    assert jnp.allclose(mask, ref_mask, atol=5e-2, rtol=5e-2)
    assert jnp.allclose(out, ref_out, atol=5e-2, rtol=5e-2)
    assert bool(jnp.all((mask > 0.0) & (mask < 1.0)))

    print("KERNEL_OK")
</pallas_src>

<mosaic_0001>
module attributes {stable_mosaic.version = 11 : i64} {
  func.func @_bernoulli_roi_kernel(%arg0: i32, %arg1: memref<16x32xf32, #tpu.memory_space<vmem>>, %arg2: memref<32x64xbf16, #tpu.memory_space<vmem>>, %arg3: memref<1x64xf32, #tpu.memory_space<vmem>>, %arg4: memref<64x32xbf16, #tpu.memory_space<vmem>>, %arg5: memref<1x32xf32, #tpu.memory_space<vmem>>, %arg6: memref<1x32xf32, #tpu.memory_space<vmem>>, %arg7: memref<1xf32, #tpu.memory_space<smem>>, %arg8: memref<16x32xf32, #tpu.memory_space<vmem>>, %arg9: memref<16x1xf32, #tpu.memory_space<vmem>>) attributes {dimension_semantics = [#tpu.dimension_semantics<parallel>], iteration_bounds = array<i64: 1>, scalar_prefetch = 0 : i64, scratch_operands = 0 : i64, tpu.core_type = #tpu.core_type<tc>, window_params = [{transform_indices = @transform_0, window_bounds = array<i64: 16, 32>}, {pipeline_mode = #tpu.pipeline_mode<synchronous>, transform_indices = @transform_1, window_bounds = array<i64: 32, 64>}, {pipeline_mode = #tpu.pipeline_mode<synchronous>, transform_indices = @transform_2, window_bounds = array<i64: 1, 64>}, {pipeline_mode = #tpu.pipeline_mode<synchronous>, transform_indices = @transform_3, window_bounds = array<i64: 64, 32>}, {pipeline_mode = #tpu.pipeline_mode<synchronous>, transform_indices = @transform_4, window_bounds = array<i64: 1, 32>}, {pipeline_mode = #tpu.pipeline_mode<synchronous>, transform_indices = @transform_5, window_bounds = array<i64: 1, 32>}, {transform_indices = @transform_6, window_bounds = array<i64: 1>}, {transform_indices = @transform_7, window_bounds = array<i64: 16, 32>}, {transform_indices = @transform_8, window_bounds = array<i64: 16, 1>}]} {
    %c0 = arith.constant 0 : index
    %c0_0 = arith.constant 0 : index
    %0 = vector.load %arg1[%c0, %c0_0] : memref<16x32xf32, #tpu.memory_space<vmem>>, vector<16x32xf32>
    %1 = arith.truncf %0 : vector<16x32xf32> to vector<16x32xbf16>
    %c0_1 = arith.constant 0 : index
    %c0_2 = arith.constant 0 : index
    %2 = vector.load %arg2[%c0_1, %c0_2] : memref<32x64xbf16, #tpu.memory_space<vmem>>, vector<32x64xbf16>
    %cst = arith.constant dense<0.000000e+00> : vector<16x64xf32>
    %3 = tpu.matmul %1, %2, %cst {dimension_numbers = #tpu.dot_dimension_numbers<[1], [0], [0], [1], [0, 0, 1, 1], [], []>} : vector<16x32xbf16>, vector<32x64xbf16>, vector<16x64xf32> -> vector<16x64xf32>
    %c0_3 = arith.constant 0 : index
    %c0_4 = arith.constant 0 : index
    %4 = vector.load %arg3[%c0_3, %c0_4] : memref<1x64xf32, #tpu.memory_space<vmem>>, vector<1x64xf32>
    %5 = vector.broadcast %4 : vector<1x64xf32> to vector<16x64xf32>
    %6 = arith.addf %3, %5 : vector<16x64xf32>
    %cst_5 = arith.constant 0.000000e+00 : f32
    %7 = vector.broadcast %cst_5 : f32 to vector<16x64xf32>
    %8 = arith.maximumf %6, %7 : vector<16x64xf32>
    %9 = arith.truncf %8 : vector<16x64xf32> to vector<16x64xbf16>
    %c0_6 = arith.constant 0 : index
    %c0_7 = arith.constant 0 : index
    %10 = vector.load %arg4[%c0_6, %c0_7] : memref<64x32xbf16, #tpu.memory_space<vmem>>, vector<64x32xbf16>
    %cst_8 = arith.constant dense<0.000000e+00> : vector<16x32xf32>
    %11 = tpu.matmul %9, %10, %cst_8 {dimension_numbers = #tpu.dot_dimension_numbers<[1], [0], [0], [1], [0, 0, 1, 1], [], []>} : vector<16x64xbf16>, vector<64x32xbf16>, vector<16x32xf32> -> vector<16x32xf32>
    %c0_9 = arith.constant 0 : index
    %c0_10 = arith.constant 0 : index
    %12 = vector.load %arg5[%c0_9, %c0_10] : memref<1x32xf32, #tpu.memory_space<vmem>>, vector<1x32xf32>
    %13 = vector.broadcast %12 : vector<1x32xf32> to vector<16x32xf32>
    %14 = arith.addf %11, %13 : vector<16x32xf32>
    %cst_11 = arith.constant 0.000000e+00 : f32
    %15 = vector.broadcast %cst_11 : f32 to vector<16x32xf32>
    %16 = arith.maximumf %14, %15 : vector<16x32xf32>
    %c0_12 = arith.constant 0 : index
    %c0_13 = arith.constant 0 : index
    %17 = vector.load %arg6[%c0_12, %c0_13] : memref<1x32xf32, #tpu.memory_space<vmem>>, vector<1x32xf32>
    %18 = vector.broadcast %17 : vector<1x32xf32> to vector<16x32xf32>
    %19 = arith.mulf %16, %18 : vector<16x32xf32>
    %cst_14 = arith.constant dense<0.000000e+00> : vector<16xf32>
    %20 = vector.multi_reduction <add>, %19, %cst_14 [1] : vector<16x32xf32> to vector<16xf32>
    %21 = vector.shape_cast %20 : vector<16xf32> to vector<16x1xf32>
    %c0_15 = arith.constant 0 : index
    %22 = memref.load %arg7[%c0_15] : memref<1xf32, #tpu.memory_space<smem>>
    %23 = vector.broadcast %22 : f32 to vector<16x1xf32>
    %24 = arith.addf %21, %23 : vector<16x1xf32>
    %cst_16 = arith.constant 0.000000e+00 : f32
    %25 = vector.broadcast %cst_16 : f32 to vector<16x1xf32>
    %26 = arith.subf %25, %24 : vector<16x1xf32>
    %27 = math.exp %26 : vector<16x1xf32>
    %cst_17 = arith.constant 1.000000e+00 : f32
    %28 = vector.broadcast %cst_17 : f32 to vector<16x1xf32>
    %29 = arith.addf %28, %27 : vector<16x1xf32>
    %30 = tpu.reciprocal %29 {approx = true} : vector<16x1xf32> -> vector<16x1xf32>
    %c0_18 = arith.constant 0 : index
    %c0_19 = arith.constant 0 : index
    %31 = vector.load %arg9[%c0_18, %c0_19] : memref<16x1xf32, #tpu.memory_space<vmem>>, vector<16x1xf32>
    tpu.vector_store %arg9[%c0_18, %c0_19], %30 {strides = array<i32>} : memref<16x1xf32, #tpu.memory_space<vmem>>, vector<16x1xf32>,
    %32 = vector.broadcast %30 : vector<16x1xf32> to vector<16x32xf32>
    %33 = arith.mulf %0, %32 : vector<16x32xf32>
    %c0_20 = arith.constant 0 : index
    %c0_21 = arith.constant 0 : index
    %34 = vector.load %arg8[%c0_20, %c0_21] : memref<16x32xf32, #tpu.memory_space<vmem>>, vector<16x32xf32>
    tpu.vector_store %arg8[%c0_20, %c0_21], %33 {strides = array<i32>} : memref<16x32xf32, #tpu.memory_space<vmem>>, vector<16x32xf32>,
    return
  }
  func.func @transform_0(%arg0: i32) -> (i32, i32) {
    %c0_i32 = arith.constant 0 : i32
    %c0_i32_0 = arith.constant 0 : i32
    return %arg0, %c0_i32 : i32, i32
  }
  func.func @transform_1(%arg0: i32) -> (i32, i32) {
    %c0_i32 = arith.constant 0 : i32
    %c0_i32_0 = arith.constant 0 : i32
    %c0_i32_1 = arith.constant 0 : i32
    return %c0_i32, %c0_i32_0 : i32, i32
  }
  func.func @transform_2(%arg0: i32) -> (i32, i32) {
    %c0_i32 = arith.constant 0 : i32
    %c0_i32_0 = arith.constant 0 : i32
    %c0_i32_1 = arith.constant 0 : i32
    return %c0_i32, %c0_i32_0 : i32, i32
  }
  func.func @transform_3(%arg0: i32) -> (i32, i32) {
    %c0_i32 = arith.constant 0 : i32
    %c0_i32_0 = arith.constant 0 : i32
    %c0_i32_1 = arith.constant 0 : i32
    return %c0_i32, %c0_i32_0 : i32, i32
  }
  func.func @transform_4(%arg0: i32) -> (i32, i32) {
    %c0_i32 = arith.constant 0 : i32
    %c0_i32_0 = arith.constant 0 : i32
    %c0_i32_1 = arith.constant 0 : i32
    return %c0_i32, %c0_i32_0 : i32, i32
  }
  func.func @transform_5(%arg0: i32) -> (i32, i32) {
    %c0_i32 = arith.constant 0 : i32
    %c0_i32_0 = arith.constant 0 : i32
    %c0_i32_1 = arith.constant 0 : i32
    return %c0_i32, %c0_i32_0 : i32, i32
  }
  func.func @transform_6(%arg0: i32) -> i32 {
    %c0_i32 = arith.constant 0 : i32
    %c0_i32_0 = arith.constant 0 : i32
    return %c0_i32 : i32
  }
  func.func @transform_7(%arg0: i32) -> (i32, i32) {
    %c0_i32 = arith.constant 0 : i32
    %c0_i32_0 = arith.constant 0 : i32
    return %arg0, %c0_i32 : i32, i32
  }
  func.func @transform_8(%arg0: i32) -> (i32, i32) {
    %c0_i32 = arith.constant 0 : i32
    %c0_i32_0 = arith.constant 0 : i32
    return %arg0, %c0_i32 : i32, i32
  }
}

</mosaic_0001>

<llo_original>
// kernel: tpu_custom_call.1
$region0: #{tpu_custom_call.1}
  #allocation0 [shape = 'u32[]', space=smem, size = 0x4, offset = 0x4, fixed_abs, tag = 'smem constant byte address 0x4 - core index']
  #allocation1 [shape = 'u32[144,128]{1,0:T(1,128)}', space=vmem, size = 0x12000, scoped, tag = 'internal scratch']
  #allocation2 [shape = 'f32[1]{0:T(128)S(6)}', space=smem, size = 0x200, scoped, tag = 'scoped memory for tpu_custom_call.1']
  %s0 = inlined_call_operand.vmem [shape: f32[16,32], index: 0, kind: input, shape index: {}]
  %s1 = inlined_call_operand.vmem [shape: bf16[32,64], index: 1, kind: input, shape index: {}]
  %s2 = inlined_call_operand.vmem [shape: f32[1,64], index: 2, kind: input, shape index: {}]
  %s3 = inlined_call_operand.vmem [shape: bf16[64,32], index: 3, kind: input, shape index: {}]
  %s4 = inlined_call_operand.vmem [shape: f32[1,32], index: 4, kind: input, shape index: {}]
  %s5 = inlined_call_operand.vmem [shape: f32[1,32], index: 5, kind: input, shape index: {}]
  %s6 = inlined_call_operand.<no memory space> [shape: f32[1], index: 6, kind: input, shape index: {}]
  %s7 = inlined_call_operand.hbm [shape: f32[16,32], index: 7, kind: output, shape index: {0}]
  %s8 = inlined_call_operand.vmem [shape: f32[16,1], index: 8, kind: output, shape index: {1}]
  %9 = xla_tuple %s7, %s8
  %s10 = sld [smem:[#allocation0]]
  $region46: #{tpu_custom_call.1} parent=0
    _
  %s12 = ssub.s32 1, %s10
  %s13 = scalar_select 0, %s12, %s10
  %14 = sst [smem:[#allocation2]] %s6
  $region1: #{tpu_custom_call.1} parent=0
    #allocation3 [shape = 'u8[8192]{0}', space=vmem, size = 0x2000, scoped, tag = 'output window, operand 0, single buffered']
    #allocation4 [shape = 's32[1]{0}', space=sflag, size = 0x4, scoped, tag = 'scoped memory for tpu_custom_call.1']
    %15 = vsyncpa [#allocation4], 0
    // Predicated region
    $region2: #{tpu_custom_call.1} parent=1 // pred_check
      _
    $region3: #{tpu_custom_call.1} parent=1 // pred_check_branch
      %17 = sbr.rel (0) target = $region5
    $region4: #{tpu_custom_call.1} parent=1 // pred_region
      _
    $region5: #{tpu_custom_call.1} parent=1 // pred_fallthru
      _
    // Predicated region
    $region6: #{tpu_custom_call.1} parent=1 // pred_check
      _
    $region7: #{tpu_custom_call.1} parent=1 // pred_check_branch
      %19 = sbr.rel (0) target = $region9
    $region8: #{tpu_custom_call.1} parent=1 // pred_region
      _
    $region9: #{tpu_custom_call.1} parent=1 // pred_fallthru
      _
    // Predicated region
    $region10: #{tpu_custom_call.1} parent=1 // pred_check
      _
    $region11: #{tpu_custom_call.1} parent=1 // pred_check_branch
      %21 = sbr.rel (0) target = $region13
    $region12: #{tpu_custom_call.1} parent=1 // pred_region
      _
    $region13: #{tpu_custom_call.1} parent=1 // pred_fallthru
      _
    // Predicated region
    $region14: #{tpu_custom_call.1} parent=1 // pred_check
      _
    $region15: #{tpu_custom_call.1} parent=1 // pred_check_branch
      %23 = sbr.rel (0) target = $region17
    $region16: #{tpu_custom_call.1} parent=1 // pred_region
      _
    $region17: #{tpu_custom_call.1} parent=1 // pred_fallthru
      _
    // Predicated region
    $region18: #{tpu_custom_call.1} parent=1 // pred_check
      _
    $region19: #{tpu_custom_call.1} parent=1 // pred_check_branch
      %25 = sbr.rel (0) target = $region21
    $region20: #{tpu_custom_call.1} parent=1 // pred_region
      _
    $region21: #{tpu_custom_call.1} parent=1 // pred_fallthru
      _
    // Predicated region
    $region22: #{tpu_custom_call.1} parent=1 // pred_check
      _
    $region23: #{tpu_custom_call.1} parent=1 // pred_check_branch
      %27 = sbr.rel (0) target = $region25
    $region24: #{tpu_custom_call.1} parent=1 // pred_region
      _
    $region25: #{tpu_custom_call.1} parent=1 // pred_fallthru
      _
    // Predicated region
    $region26: #{tpu_custom_call.1} parent=1 // pred_check
      _
    $region27: #{tpu_custom_call.1} parent=1 // pred_check_branch
      %29 = sbr.rel (0) target = $region29
    $region28: #{tpu_custom_call.1} parent=1 // pred_region
      _
    $region29: #{tpu_custom_call.1} parent=1 // pred_fallthru
      _
    %v31 = vld [vmem:[%s0] sm:$0xff]
    %v32 = vld [vmem:[%s0 + $0x8] sm:$0xff]
    %v33 = vpack.c.bf16 %v32, %v31
    %v34 = vld [vmem:[%s1] sm:$0xf]
    %v35 = vld [vmem:[%s1 + $0x4] sm:$0xf]
    %v36 = vld [vmem:[%s1 + $0x8] sm:$0xf]
    %v37 = vld [vmem:[%s1 + $0xc] sm:$0xf]
    %v38 = vld [vmem:[%s2] sm:$0x1]
    %v40 = vlaneseq
    %v41 = vshrl.u32 %v40, 7
    %v42 = vsub.s32 0, %v41
    %v43 = vrot.slane %v38, %v42
    %v49 = vunpack.c.l.b16 %v34
    %v50 = vunpack.c.l.b16 %v35
    %v51 = vunpack.c.l.b16 %v36
    %v52 = vunpack.c.l.b16 %v37
    %v53 = vpack.c.b16 %v50, %v49
    %v54 = vpack.c.b16 %v52, %v51
    %vm57 = vcmask 261120
    %v59 = vsel %vm57, %v33, 0
    %61 = vmatprep.subr.bf16.mxu0 0
    %62 = vmatpush1.bf16.msra.mxu0 0
    %63 = vmatprep.subr.bf16.mxu0 0
    %64 = vmatpush1.bf16.msra.mxu0 0
    %65 = vmatprep.subr.bf16.mxu0 0
    %66 = vmatpush1.bf16.msra.mxu0 0
    %67 = vmatprep.subr.bf16.mxu0 0
    %68 = vmatpush1.bf16.msra.mxu0 0
    %69 = vmatprep.subr.bf16.mxu0 0
    %70 = vmatpush1.bf16.msra.mxu0 0
    %71 = vmatprep.subr.bf16.mxu0 0
    %72 = vmatpush1.bf16.msra.mxu0 0
    %73 = vmatprep.subr.bf16.mxu0 0
    %74 = vmatpush1.bf16.msra.mxu0 %v54
    %75 = vmatprep.subr.bf16.mxu0 0
    %76 = vmatpush1.bf16.msra.mxu0 %v53
    %77 = vmatprep.subr.bf16.mxu0 0
    %78 = vmatpush2.bf16.msra.mxu0 0
    %79 = vmatprep.subr.bf16.mxu0 0
    %80 = vmatpush2.bf16.msra.mxu0 0
    %81 = vmatprep.subr.bf16.mxu0 0
    %82 = vmatpush2.bf16.msra.mxu0 0
    %83 = vmatprep.subr.bf16.mxu0 0
    %84 = vmatpush2.bf16.msra.mxu0 0
    %85 = vmatprep.subr.bf16.mxu0 0
    %86 = vmatpush2.bf16.msra.mxu0 0
    %87 = vmatprep.subr.bf16.mxu0 0
    %88 = vmatpush2.bf16.msra.mxu0 0
    %89 = vmatprep.subr.bf16.mxu0 0
    %90 = vmatpush2.bf16.msra.mxu0 0
    %91 = vmatprep.subr.bf16.mxu0 0
    %92 = vmatpush2.bf16.msra.mxu0 0
    %93 = vmatprep.mubr.bf16.mxu0 0
    %94 = vmatmul.mubr.bf16.gmra.mxu0 %v59
    %v95 = vpop.f32.mrf.mxu0
    %v96 = vadd.f32 %v43, %v95
    %v97 = vpop.f32.mrf.mxu0
    %v98 = vpop.f32.mrf.mxu0
    %v99 = vadd.f32 %v43, %v98
    %v100 = vpop.f32.mrf.mxu0
    %101 = vdwg.mxu0
    %v102 = vmax.f32 %v96, 0.0
    %v103 = vmax.f32 %v99, 0.0
    %v104 = vpack.c.bf16 %v103, %v102
    %v105 = vld [vmem:[%s3] sm:$0xf]
    %v106 = vld [vmem:[%s3 + $0x4] sm:$0xf]
    %v107 = vld [vmem:[%s3 + $0x8] sm:$0xf]
    %v108 = vld [vmem:[%s3 + $0xc] sm:$0xf]
    %v109 = vld [vmem:[%s3 + $0x10] sm:$0xf]
    %v110 = vld [vmem:[%s3 + $0x14] sm:$0xf]
    %v111 = vld [vmem:[%s3 + $0x18] sm:$0xf]
    %v112 = vld [vmem:[%s3 + $0x1c] sm:$0xf]
    %v113 = vld [vmem:[%s4] sm:$0x1]
    %v115 = vlaneseq
    %v116 = vshrl.u32 %v115, 7
    %v117 = vsub.s32 0, %v116
    %v118 = vrot.slane %v113, %v117
    %v128 = vunpack.c.l.b16 %v105
    %v129 = vunpack.c.l.b16 %v106
    %v130 = vunpack.c.l.b16 %v107
    %v131 = vunpack.c.l.b16 %v108
    %v132 = vunpack.c.l.b16 %v109
    %v133 = vunpack.c.l.b16 %v110
    %v134 = vunpack.c.l.b16 %v111
    %v135 = vunpack.c.l.b16 %v112
    %v136 = vpack.c.b16 %v129, %v128
    %v137 = vpack.c.b16 %v131, %v130
    %v138 = vpack.c.b16 %v133, %v132
    %v139 = vpack.c.b16 %v135, %v134
    %vm144 = vcmask 523264
    %v146 = vsel %vm144, %v104, 0
    %148 = vmatprep.subr.bf16.mxu0 0
    %149 = vmatpush1.bf16.msra.mxu0 0
    %150 = vmatprep.subr.bf16.mxu0 0
    %151 = vmatpush1.bf16.msra.mxu0 0
    %152 = vmatprep.subr.bf16.mxu0 0
    %153 = vmatpush1.bf16.msra.mxu0 0
    %154 = vmatprep.subr.bf16.mxu0 0
    %155 = vmatpush1.bf16.msra.mxu0 0
    %156 = vmatprep.subr.bf16.mxu0 0
    %157 = vmatpush1.bf16.msra.mxu0 %v139
    %158 = vmatprep.subr.bf16.mxu0 0
    %159 = vmatpush1.bf16.msra.mxu0 %v138
    %160 = vmatprep.subr.bf16.mxu0 0
    %161 = vmatpush1.bf16.msra.mxu0 %v137
    %162 = vmatprep.subr.bf16.mxu0 0
    %163 = vmatpush1.bf16.msra.mxu0 %v136
    %164 = vmatprep.subr.bf16.mxu0 0
    %165 = vmatpush2.bf16.msra.mxu0 0
    %166 = vmatprep.subr.bf16.mxu0 0
    %167 = vmatpush2.bf16.msra.mxu0 0
    %168 = vmatprep.subr.bf16.mxu0 0
    %169 = vmatpush2.bf16.msra.mxu0 0
    %170 = vmatprep.subr.bf16.mxu0 0
    %171 = vmatpush2.bf16.msra.mxu0 0
    %172 = vmatprep.subr.bf16.mxu0 0
    %173 = vmatpush2.bf16.msra.mxu0 0
    %174 = vmatprep.subr.bf16.mxu0 0
    %175 = vmatpush2.bf16.msra.mxu0 0
    %176 = vmatprep.subr.bf16.mxu0 0
    %177 = vmatpush2.bf16.msra.mxu0 0
    %178 = vmatprep.subr.bf16.mxu0 0
    %179 = vmatpush2.bf16.msra.mxu0 0
    %180 = vmatprep.mubr.bf16.mxu0 0
    %181 = vmatmul.mubr.bf16.gmra.mxu0 %v146
    %v182 = vpop.f32.mrf.mxu0
    %v183 = vadd.f32 %v118, %v182
    %v184 = vpop.f32.mrf.mxu0
    %v185 = vpop.f32.mrf.mxu0
    %v186 = vadd.f32 %v118, %v185
    %v187 = vpop.f32.mrf.mxu0
    %188 = vdwg.mxu0
    %v189 = vmax.f32 %v183, 0.0
    %v190 = vmax.f32 %v186, 0.0
    %v191 = vld [vmem:[%s5] sm:$0x1]
    %v193 = vlaneseq
    %v194 = vshrl.u32 %v193, 7
    %v195 = vsub.s32 0, %v194
    %v196 = vrot.slane %v191, %v195
    %v198 = vmul.f32 %v189, %v196
    %v199 = vmul.f32 %v190, %v196
    %v200 = vsel %vm57, %v198, 0.0
    %201 = vadd.xlane.f32.xlu0 %v200
    %v202 = vpop.xlane.xlu0 %201
    %v203 = vsel %vm57, %v199, 0.0
    %204 = vadd.xlane.f32.xlu0 %v203
    %v205 = vpop.xlane.xlu0 %204
    %s206 = sld [smem:[#allocation2]]
    %v207 = vstv %s206
    %v208 = vadd.f32 %v202, %v207
    %v209 = vadd.f32 %v205, %v207
    %v210 = vsub.f32 0.0, %v208
    %v211 = vsub.f32 0.0, %v209
    %v212 = vmul.f32 %v210, 1.442695
    %v213 = vpow.pop %v212
    %v214 = vmul.f32 %v211, 1.442695
    %v215 = vpow.pop %v214
    %v216 = vadd.f32 %v213, 1.0
    %v217 = vadd.f32 %v215, 1.0
    %v218 = vrcp.pop %v216
    %v219 = vrcp.pop %v217
    %vm220 = vcmask 7168
    %221 = vst.msk [vmem:[%s8] sm:$0xff] %vm220, %v218
    %222 = vst.msk [vmem:[%s8 + $0x8] sm:$0xff] %vm220, %v219
    %v223 = vmul.f32 %v31, %v218
    %v224 = vmul.f32 %v32, %v219
    %225 = vst.msk [vmem:[#allocation3] sm:$0xff] %vm57, %v223
    %226 = vst.msk [vmem:[#allocation3 + $0x8] sm:$0xff] %vm57, %v224
    // Predicated region
    $region30: #{tpu_custom_call.1} parent=1 // pred_check
      _
    $region31: #{tpu_custom_call.1} parent=1 // pred_check_branch
      %228 = sbr.rel (0) target = $region33
    $region32: #{tpu_custom_call.1} parent=1 // pred_region
      %s230 = ssub.s32 256, 256
      %231 = vsyncadd [#allocation4], %s230
      %s232 = sshll.u32 [#allocation3], 4
      %s233 = int_to_ptr.vmem [resolvable:$true] %s232
      %238 = dma.vmem_to_hbm [thread:$0]  %s233, 256, %s7, [#allocation4], 128, 128, 8
    $region33: #{tpu_custom_call.1} parent=1 // pred_fallthru
      _
    // Predicated region
    $region34: #{tpu_custom_call.1} parent=1 // pred_check
      _
    $region35: #{tpu_custom_call.1} parent=1 // pred_check_branch
      %240 = sbr.rel (0) target = $region37
    $region36: #{tpu_custom_call.1} parent=1 // pred_region
      _
    $region37: #{tpu_custom_call.1} parent=1 // pred_fallthru
      _
    // Predicated region
    $region38: #{tpu_custom_call.1} parent=1 // pred_check
      _
    $region39: #{tpu_custom_call.1} parent=1 // pred_check_branch
      %242 = sbr.rel (0) target = $region41
    $region40: #{tpu_custom_call.1} parent=1 // pred_region
      %243 = dma.done [#allocation4], 256
    $region41: #{tpu_custom_call.1} parent=1 // pred_fallthru
      _
    // Predicated region
    $region42: #{tpu_custom_call.1} parent=1 // pred_check
      _
    $region43: #{tpu_custom_call.1} parent=1 // pred_check_branch
      %245 = sbr.rel (0) target = $region45
    $region44: #{tpu_custom_call.1} parent=1 // pred_region
      _
    $region45: #{tpu_custom_call.1} parent=1 // pred_fallthru
      _
    %246 = vsyncpa [#allocation4], 1

</llo_original>
